<compile_context>
chip_gen: v6e
topology: v6e:2x2x1
jax: 0.10.0
libtpu: 0.0.40
codegen_flags: <defaults>
</compile_context>

<pallas_src>
import functools

import jax
import jax.numpy as jnp
from jax import lax
from jax.experimental import pallas as pl
from jax.experimental.pallas import tpu as pltpu


def _temporal_block_kernel(xc_ref, w1_ref, b1_ref, w2_ref, b2_ref, o_ref, buf_ref,
                           *, L, K, dil, pad, CP):
    # ---- fused [conv1 * BN1-scale | 1x1 residual] in a single MXU matmul ----
    xc = xc_ref[0]                                                   # (L, K*Cin) im2col LHS
    y = jnp.dot(xc, w1_ref[...], preferred_element_type=jnp.float32) + b1_ref[...]
    h1 = y[:, :CP]                                                   # conv1 + bias + BN1 (affine folded)
    res = y[:, CP:]                                                  # downsample(x) + bias
    h1 = jnp.where(h1 >= 0, h1, 0.1 * h1)                            # LeakyReLU(0.1); dropout1 = identity

    # ---- depthwise causal conv2 (BN2 folded into weights / bias) ----
    acc2 = h1 * w2_ref[pl.ds(K - 1, 1), :]                           # un-shifted (last) tap, no zeros init
    if K > 1:
        # left-pad h1 in the scratch; shifted taps become plain (unaligned) VMEM reads
        buf_ref[pl.ds(0, pad), :] = jnp.zeros((pad, CP), jnp.float32)
        buf_ref[pl.ds(pad, L), :] = h1
        for k in range(K - 1):                                       # static unroll, K small
            acc2 = acc2 + buf_ref[pl.ds(k * dil, L), :] * w2_ref[pl.ds(k, 1), :]
    h2 = acc2 + b2_ref[...]
    h2 = jnp.where(h2 >= 0, h2, 0.1 * h2)                            # LeakyReLU(0.1); dropout2 = identity

    s = h2 + res
    s = jnp.where(s >= 0, s, 0.1 * s)                                # final LeakyReLU(0.1)

    # ---- MaxPool1d(kernel=2, stride=2): vectorized (no per-row masked stores) ----
    buf_ref[pl.ds(0, L), :] = s                                      # dense store (scratch reused)
    o_ref[0] = jnp.maximum(buf_ref[pl.ds(0, L // 2, 2), :],          # even time steps
                           buf_ref[pl.ds(1, L // 2, 2), :])          # odd  time steps


def temporal_block_forward(x, params, *, kernel_size, stride, dilation, padding):
    """x: (N, Cin, L) float32 (PyTorch NCL). Returns (N, Cout, L//2)."""
    assert stride == 1, "TCN TemporalBlock is used with stride=1"
    N, Cin, L = x.shape
    Cout = params['b1'].shape[0]
    K, dil, pad = kernel_size, dilation, padding
    assert pad == dil * (K - 1) and L % 2 == 0

    CP = ((Cout + 127) // 128) * 128                                 # lane-dense channel width
    eps = 1e-5
    s1 = params['bn1_gamma'] / jnp.sqrt(params['bn1_var'] + eps)
    t1 = params['bn1_beta'] - params['bn1_mean'] * s1
    s2 = params['bn2_gamma'] / jnp.sqrt(params['bn2_var'] + eps)
    t2 = params['bn2_beta'] - params['bn2_mean'] * s2

    # densify grouped conv1 weight (Cout, Cin//g, K) -> (K, Cin, Cout), fold BN1 scale
    g = Cout // 4
    cin_g, cout_g = Cin // g, Cout // g
    w1_dense = jnp.zeros((Cout, Cin, K), jnp.float32)
    for gi in range(g):
        w1_dense = w1_dense.at[gi * cout_g:(gi + 1) * cout_g,
                               gi * cin_g:(gi + 1) * cin_g, :].set(
            params['w1'][gi * cout_g:(gi + 1) * cout_g])
    w1_mat = (jnp.transpose(w1_dense, (2, 1, 0)) * s1[None, None, :]).reshape(K * Cin, Cout)

    # residual 1x1 conv (identity when Cin == Cout, matching the PyTorch module)
    if params.get('wd') is not None:
        wd_mat = jnp.transpose(params['wd'][:, :, 0], (1, 0))        # (Cin, Cout)
        bd = params['bd']
    else:
        assert Cin == Cout
        wd_mat = jnp.eye(Cin, dtype=jnp.float32)
        bd = jnp.zeros((Cout,), jnp.float32)

    # fused matmul weight (K*Cin, 2*CP): [ conv1 * s1 | residual ]; residual uses the
    # un-shifted (k = K-1) tap columns of the im2col LHS.
    w_fused = jnp.zeros((K * Cin, 2 * CP), jnp.float32)
    w_fused = w_fused.at[:, :Cout].set(w1_mat)
    w_fused = w_fused.at[(K - 1) * Cin:, CP:CP + Cout].set(wd_mat)

    # fused bias row (1, 2*CP): [ b1*s1 + t1 | bd ]
    b_fused = jnp.zeros((1, 2 * CP), jnp.float32)
    b_fused = b_fused.at[0, :Cout].set(params['b1'] * s1 + t1)
    b_fused = b_fused.at[0, CP:CP + Cout].set(bd)

    # depthwise conv2 weights / bias with BN2 folded, lane-padded
    w2_k = jnp.zeros((K, CP), jnp.float32)
    w2_k = w2_k.at[:, :Cout].set(jnp.transpose(params['w2'][:, 0, :], (1, 0)) * s2[None, :])
    b2_f = jnp.zeros((1, CP), jnp.float32)
    b2_f = b2_f.at[0, :Cout].set(params['b2'] * s2 + t2)

    # channels-last, causal left pad, im2col over the K taps (done once in XLA)
    x_nlc = jnp.transpose(x, (0, 2, 1)).astype(jnp.float32)          # (N, L, Cin)
    xp = jnp.pad(x_nlc, ((0, 0), (pad, 0), (0, 0)))                  # (N, L+pad, Cin)
    xcol = jnp.concatenate([xp[:, k * dil:k * dil + L, :] for k in range(K)],
                           axis=-1)                                  # (N, L, K*Cin)

    kernel = functools.partial(_temporal_block_kernel, L=L, K=K, dil=dil, pad=pad, CP=CP)

    # NOTE: for very long L, additionally tile the time axis (with a `pad`-sized halo)
    # to bound per-step VMEM; the batch grid alone is sufficient at these sizes.
    out_nlc = pl.pallas_call(
        kernel,
        out_shape=jax.ShapeDtypeStruct((N, L // 2, CP), jnp.float32),
        grid=(N,),
        in_specs=[
            pl.BlockSpec((1, L, K * Cin), lambda n: (n, 0, 0)),      # im2col LHS (per batch)
            pl.BlockSpec((K * Cin, 2 * CP), lambda n: (0, 0)),       # fused [conv1|res] weight
            pl.BlockSpec((1, 2 * CP), lambda n: (0, 0)),             # fused bias
            pl.BlockSpec((K, CP), lambda n: (0, 0)),                 # depthwise conv2 weight
            pl.BlockSpec((1, CP), lambda n: (0, 0)),                 # conv2 bias (+BN2 shift)
        ],
        out_specs=pl.BlockSpec((1, L // 2, CP), lambda n: (n, 0, 0)),
        scratch_shapes=[pltpu.VMEM((L + pad, CP), jnp.float32)],     # reused: causal pad + pool reads
        compiler_params=pltpu.CompilerParams(
            dimension_semantics=("parallel",),
            vmem_limit_bytes=64 * 1024 * 1024),
    )(xcol, w_fused, b_fused, w2_k, b2_f)

    return jnp.transpose(out_nlc[:, :, :Cout], (0, 2, 1))            # (N, Cout, L//2)


def ref_forward(x, params, *, kernel_size, stride, dilation, padding):
    """Pure-JAX reference (mirrors the PyTorch module in eval mode)."""
    N, Cin, L = x.shape
    Cout = params['b1'].shape[0]
    eps = 1e-5

    def bn(h, g_, b_, m_, v_):
        return (h - m_[None, :, None]) / jnp.sqrt(v_[None, :, None] + eps) \
               * g_[None, :, None] + b_[None, :, None]

    def leaky(h):
        return jnp.where(h >= 0, h, 0.1 * h)

    def conv1d(h, w, b, groups, pad_, dil_):
        y = lax.conv_general_dilated(
            h, w, window_strides=(stride,), padding=[(pad_, pad_)],
            rhs_dilation=(dil_,), dimension_numbers=('NCH', 'OIH', 'NCH'),
            feature_group_count=groups)
        return y + b[None, :, None]

    h = conv1d(x, params['w1'], params['b1'], Cout // 4, padding, dilation)
    h = bn(h, params['bn1_gamma'], params['bn1_beta'], params['bn1_mean'], params['bn1_var'])
    h = leaky(h[:, :, :L])                                # chomp1 + relu1 (dropout = id)
    h = conv1d(h, params['w2'], params['b2'], Cout, padding, dilation)
    h = bn(h, params['bn2_gamma'], params['bn2_beta'], params['bn2_mean'], params['bn2_var'])
    h = leaky(h[:, :, :L])                                # chomp2 + relu2 (dropout = id)
    res = conv1d(x, params['wd'], params['bd'], 1, 0, 1)  # downsample (Cin != Cout)
    s = leaky(h + res)
    return s.reshape(N, Cout, L // 2, 2).max(axis=-1)     # MaxPool1d(2, 2)


if __name__ == "__main__":
    # n_inputs=4, n_outputs=8 -> downsample path active; groups1 = 8//4 = 2
    N, Cin, Cout, L = 2, 4, 8, 16
    K, STRIDE, DIL = 3, 1, 1
    PAD = (K - 1) * DIL

    key = jax.random.PRNGKey(0)
    ks = jax.random.split(key, 15)
    g1 = Cout // 4

    x = jax.random.normal(ks[0], (N, Cin, L), jnp.float32)
    params = dict(
        w1=0.1 * jax.random.normal(ks[1], (Cout, Cin // g1, K), jnp.float32),
        b1=0.1 * jax.random.normal(ks[2], (Cout,), jnp.float32),
        w2=0.1 * jax.random.normal(ks[3], (Cout, 1, K), jnp.float32),
        b2=0.1 * jax.random.normal(ks[4], (Cout,), jnp.float32),
        wd=0.1 * jax.random.normal(ks[5], (Cout, Cin, 1), jnp.float32),
        bd=0.1 * jax.random.normal(ks[6], (Cout,), jnp.float32),
        bn1_gamma=1.0 + 0.1 * jax.random.normal(ks[7], (Cout,), jnp.float32),
        bn1_beta=0.1 * jax.random.normal(ks[8], (Cout,), jnp.float32),
        bn1_mean=0.1 * jax.random.normal(ks[9], (Cout,), jnp.float32),
        bn1_var=jnp.abs(1.0 + 0.1 * jax.random.normal(ks[10], (Cout,), jnp.float32)),
        bn2_gamma=1.0 + 0.1 * jax.random.normal(ks[11], (Cout,), jnp.float32),
        bn2_beta=0.1 * jax.random.normal(ks[12], (Cout,), jnp.float32),
        bn2_mean=0.1 * jax.random.normal(ks[13], (Cout,), jnp.float32),
        bn2_var=jnp.abs(1.0 + 0.1 * jax.random.normal(ks[14], (Cout,), jnp.float32)),
    )

    out = temporal_block_forward(x, params, kernel_size=K, stride=STRIDE,
                                 dilation=DIL, padding=PAD)
    out = jax.block_until_ready(out)

    ref = ref_forward(x, params, kernel_size=K, stride=STRIDE,
                      dilation=DIL, padding=PAD)

    assert out.shape == (N, Cout, L // 2), out.shape
    if not jnp.allclose(out, ref, rtol=1e-4, atol=1e-4):
        raise AssertionError(f"max abs diff = {float(jnp.max(jnp.abs(out - ref)))}")
    print("KERNEL_OK")
</pallas_src>

<mosaic_0001>
module attributes {stable_mosaic.version = 11 : i64} {
  func.func @_temporal_block_kernel(%arg0: i32, %arg1: memref<1x16x12xf32, #tpu.memory_space<vmem>>, %arg2: memref<12x256xf32, #tpu.memory_space<vmem>>, %arg3: memref<1x256xf32, #tpu.memory_space<vmem>>, %arg4: memref<3x128xf32, #tpu.memory_space<vmem>>, %arg5: memref<1x128xf32, #tpu.memory_space<vmem>>, %arg6: memref<1x8x128xf32, #tpu.memory_space<vmem>>, %arg7: memref<18x128xf32, #tpu.memory_space<vmem>>) attributes {dimension_semantics = [#tpu.dimension_semantics<parallel>], iteration_bounds = array<i64: 2>, scalar_prefetch = 0 : i64, scratch_operands = 1 : i64, tpu.core_type = #tpu.core_type<tc>, window_params = [{transform_indices = @transform_0, window_bounds = array<i64: 1, 16, 12>}, {pipeline_mode = #tpu.pipeline_mode<synchronous>, transform_indices = @transform_1, window_bounds = array<i64: 12, 256>}, {pipeline_mode = #tpu.pipeline_mode<synchronous>, transform_indices = @transform_2, window_bounds = array<i64: 1, 256>}, {pipeline_mode = #tpu.pipeline_mode<synchronous>, transform_indices = @transform_3, window_bounds = array<i64: 3, 128>}, {pipeline_mode = #tpu.pipeline_mode<synchronous>, transform_indices = @transform_4, window_bounds = array<i64: 1, 128>}, {transform_indices = @transform_5, window_bounds = array<i64: 1, 8, 128>}]} {
    %c0 = arith.constant 0 : index
    %c0_0 = arith.constant 0 : index
    %c0_1 = arith.constant 0 : index
    %0 = vector.load %arg1[%c0, %c0_0, %c0_1] : memref<1x16x12xf32, #tpu.memory_space<vmem>>, vector<1x16x12xf32>
    %1 = vector.shape_cast %0 : vector<1x16x12xf32> to vector<16x12xf32>
    %c0_2 = arith.constant 0 : index
    %c0_3 = arith.constant 0 : index
    %2 = vector.load %arg2[%c0_2, %c0_3] : memref<12x256xf32, #tpu.memory_space<vmem>>, vector<12x256xf32>
    %cst = arith.constant dense<0.000000e+00> : vector<16x256xf32>
    %3 = tpu.matmul %1, %2, %cst {dimension_numbers = #tpu.dot_dimension_numbers<[1], [0], [0], [1], [0, 0, 1, 1], [], []>} : vector<16x12xf32>, vector<12x256xf32>, vector<16x256xf32> -> vector<16x256xf32>
    %c0_4 = arith.constant 0 : index
    %c0_5 = arith.constant 0 : index
    %4 = vector.load %arg3[%c0_4, %c0_5] : memref<1x256xf32, #tpu.memory_space<vmem>>, vector<1x256xf32>
    %5 = vector.broadcast %4 : vector<1x256xf32> to vector<16x256xf32>
    %6 = arith.addf %3, %5 : vector<16x256xf32>
    %7 = vector.extract_strided_slice %6 {offsets = [0, 0], sizes = [16, 128], strides = [1, 1]} : vector<16x256xf32> to vector<16x128xf32>
    %8 = vector.extract_strided_slice %6 {offsets = [0, 128], sizes = [16, 128], strides = [1, 1]} : vector<16x256xf32> to vector<16x128xf32>
    %cst_6 = arith.constant 0.000000e+00 : f32
    %9 = vector.broadcast %cst_6 : f32 to vector<16x128xf32>
    %10 = arith.cmpf oge, %7, %9 : vector<16x128xf32>
    %cst_7 = arith.constant 1.000000e-01 : f32
    %11 = vector.broadcast %cst_7 : f32 to vector<16x128xf32>
    %12 = arith.mulf %11, %7 : vector<16x128xf32>
    %13 = arith.select %10, %7, %12 : vector<16x128xi1>, vector<16x128xf32>
    %c2 = arith.constant 2 : index
    %c0_8 = arith.constant 0 : index
    %14 = vector.load %arg4[%c2, %c0_8] : memref<3x128xf32, #tpu.memory_space<vmem>>, vector<1x128xf32>
    %15 = vector.broadcast %14 : vector<1x128xf32> to vector<16x128xf32>
    %16 = arith.mulf %13, %15 : vector<16x128xf32>
    %cst_9 = arith.constant 0.000000e+00 : f32
    %17 = vector.broadcast %cst_9 : f32 to vector<2x128xf32>
    %c0_10 = arith.constant 0 : index
    %c0_11 = arith.constant 0 : index
    %18 = vector.load %arg7[%c0_10, %c0_11] : memref<18x128xf32, #tpu.memory_space<vmem>>, vector<2x128xf32>
    tpu.vector_store %arg7[%c0_10, %c0_11], %17 {strides = array<i32>} : memref<18x128xf32, #tpu.memory_space<vmem>>, vector<2x128xf32>,
    %c2_12 = arith.constant 2 : index
    %c0_13 = arith.constant 0 : index
    %19 = vector.load %arg7[%c2_12, %c0_13] : memref<18x128xf32, #tpu.memory_space<vmem>>, vector<16x128xf32>
    tpu.vector_store %arg7[%c2_12, %c0_13], %13 {strides = array<i32>} : memref<18x128xf32, #tpu.memory_space<vmem>>, vector<16x128xf32>,
    %c0_14 = arith.constant 0 : index
    %c0_15 = arith.constant 0 : index
    %20 = vector.load %arg7[%c0_14, %c0_15] : memref<18x128xf32, #tpu.memory_space<vmem>>, vector<16x128xf32>
    %c0_16 = arith.constant 0 : index
    %c0_17 = arith.constant 0 : index
    %21 = vector.load %arg4[%c0_16, %c0_17] : memref<3x128xf32, #tpu.memory_space<vmem>>, vector<1x128xf32>
    %22 = vector.broadcast %21 : vector<1x128xf32> to vector<16x128xf32>
    %23 = arith.mulf %20, %22 : vector<16x128xf32>
    %24 = arith.addf %16, %23 : vector<16x128xf32>
    %c1 = arith.constant 1 : index
    %c0_18 = arith.constant 0 : index
    %25 = vector.load %arg7[%c1, %c0_18] : memref<18x128xf32, #tpu.memory_space<vmem>>, vector<16x128xf32>
    %c1_19 = arith.constant 1 : index
    %c0_20 = arith.constant 0 : index
    %26 = vector.load %arg4[%c1_19, %c0_20] : memref<3x128xf32, #tpu.memory_space<vmem>>, vector<1x128xf32>
    %27 = vector.broadcast %26 : vector<1x128xf32> to vector<16x128xf32>
    %28 = arith.mulf %25, %27 : vector<16x128xf32>
    %29 = arith.addf %24, %28 : vector<16x128xf32>
    %c0_21 = arith.constant 0 : index
    %c0_22 = arith.constant 0 : index
    %30 = vector.load %arg5[%c0_21, %c0_22] : memref<1x128xf32, #tpu.memory_space<vmem>>, vector<1x128xf32>
    %31 = vector.broadcast %30 : vector<1x128xf32> to vector<16x128xf32>
    %32 = arith.addf %29, %31 : vector<16x128xf32>
    %cst_23 = arith.constant 0.000000e+00 : f32
    %33 = vector.broadcast %cst_23 : f32 to vector<16x128xf32>
    %34 = arith.cmpf oge, %32, %33 : vector<16x128xf32>
    %cst_24 = arith.constant 1.000000e-01 : f32
    %35 = vector.broadcast %cst_24 : f32 to vector<16x128xf32>
    %36 = arith.mulf %35, %32 : vector<16x128xf32>
    %37 = arith.select %34, %32, %36 : vector<16x128xi1>, vector<16x128xf32>
    %38 = arith.addf %37, %8 : vector<16x128xf32>
    %cst_25 = arith.constant 0.000000e+00 : f32
    %39 = vector.broadcast %cst_25 : f32 to vector<16x128xf32>
    %40 = arith.cmpf oge, %38, %39 : vector<16x128xf32>
    %cst_26 = arith.constant 1.000000e-01 : f32
    %41 = vector.broadcast %cst_26 : f32 to vector<16x128xf32>
    %42 = arith.mulf %41, %38 : vector<16x128xf32>
    %43 = arith.select %40, %38, %42 : vector<16x128xi1>, vector<16x128xf32>
    %c0_27 = arith.constant 0 : index
    %c0_28 = arith.constant 0 : index
    %44 = vector.load %arg7[%c0_27, %c0_28] : memref<18x128xf32, #tpu.memory_space<vmem>>, vector<16x128xf32>
    tpu.vector_store %arg7[%c0_27, %c0_28], %43 {strides = array<i32>} : memref<18x128xf32, #tpu.memory_space<vmem>>, vector<16x128xf32>,
    %c0_29 = arith.constant 0 : index
    %c0_30 = arith.constant 0 : index
    %45 = tpu.strided_load %arg7[%c0_29, %c0_30] {strides = array<i32: 2, 1>} : memref<18x128xf32, #tpu.memory_space<vmem>>, vector<8x128xf32>
    %c1_31 = arith.constant 1 : index
    %c0_32 = arith.constant 0 : index
    %46 = tpu.strided_load %arg7[%c1_31, %c0_32] {strides = array<i32: 2, 1>} : memref<18x128xf32, #tpu.memory_space<vmem>>, vector<8x128xf32>
    %47 = arith.maximumf %45, %46 : vector<8x128xf32>
    %c0_33 = arith.constant 0 : index
    %c0_34 = arith.constant 0 : index
    %c0_35 = arith.constant 0 : index
    %48 = vector.load %arg6[%c0_33, %c0_34, %c0_35] : memref<1x8x128xf32, #tpu.memory_space<vmem>>, vector<1x8x128xf32>
    %49 = vector.shape_cast %48 : vector<1x8x128xf32> to vector<8x128xf32>
    %50 = vector.shape_cast %47 : vector<8x128xf32> to vector<1x8x128xf32>
    tpu.vector_store %arg6[%c0_33, %c0_34, %c0_35], %50 {strides = array<i32>} : memref<1x8x128xf32, #tpu.memory_space<vmem>>, vector<1x8x128xf32>,
    return
  }
  func.func @transform_0(%arg0: i32) -> (i32, i32, i32) {
    %c0_i32 = arith.constant 0 : i32
    %c0_i32_0 = arith.constant 0 : i32
    %c0_i32_1 = arith.constant 0 : i32
    return %arg0, %c0_i32, %c0_i32_0 : i32, i32, i32
  }
  func.func @transform_1(%arg0: i32) -> (i32, i32) {
    %c0_i32 = arith.constant 0 : i32
    %c0_i32_0 = arith.constant 0 : i32
    %c0_i32_1 = arith.constant 0 : i32
    return %c0_i32, %c0_i32_0 : i32, i32
  }
  func.func @transform_2(%arg0: i32) -> (i32, i32) {
    %c0_i32 = arith.constant 0 : i32
    %c0_i32_0 = arith.constant 0 : i32
    %c0_i32_1 = arith.constant 0 : i32
    return %c0_i32, %c0_i32_0 : i32, i32
  }
  func.func @transform_3(%arg0: i32) -> (i32, i32) {
    %c0_i32 = arith.constant 0 : i32
    %c0_i32_0 = arith.constant 0 : i32
    %c0_i32_1 = arith.constant 0 : i32
    return %c0_i32, %c0_i32_0 : i32, i32
  }
  func.func @transform_4(%arg0: i32) -> (i32, i32) {
    %c0_i32 = arith.constant 0 : i32
    %c0_i32_0 = arith.constant 0 : i32
    %c0_i32_1 = arith.constant 0 : i32
    return %c0_i32, %c0_i32_0 : i32, i32
  }
  func.func @transform_5(%arg0: i32) -> (i32, i32, i32) {
    %c0_i32 = arith.constant 0 : i32
    %c0_i32_0 = arith.constant 0 : i32
    %c0_i32_1 = arith.constant 0 : i32
    return %arg0, %c0_i32, %c0_i32_0 : i32, i32, i32
  }
}

</mosaic_0001>

<llo_original>
// kernel: tpu_custom_call.1
$region0: #{tpu_custom_call.1}
  #allocation0 [shape = 'u32[]', space=smem, size = 0x4, offset = 0x4, fixed_abs, tag = 'smem constant byte address 0x4 - core index']
  #allocation1 [shape = 'u32[144,128]{1,0:T(1,128)}', space=vmem, size = 0x12000, scoped, tag = 'internal scratch']
  #allocation2 [shape = 'f32[18,128]{1,0:T(8,128)}', space=vmem, size = 0x3000, scoped, tag = 'scratch operand']
  %s0 = inlined_call_operand.vmem [shape: f32[2,16,12], index: 0, kind: input, shape index: {}]
  %s1 = inlined_call_operand.vmem [shape: f32[12,256], index: 1, kind: input, shape index: {}]
  %s2 = inlined_call_operand.vmem [shape: f32[1,256], index: 2, kind: input, shape index: {}]
  %s3 = inlined_call_operand.vmem [shape: f32[3,128], index: 3, kind: input, shape index: {}]
  %s4 = inlined_call_operand.vmem [shape: f32[1,128], index: 4, kind: input, shape index: {}]
  %s5 = inlined_call_operand.hbm [shape: f32[2,8,128], index: 5, kind: output, shape index: {}]
  %s6 = sld [smem:[#allocation0]]
  $region53: #{tpu_custom_call.1} parent=0
    _
  %s8 = ssub.s32 1, %s6
  %s9 = scalar_select 0, %s8, %s6
  $region1: #{tpu_custom_call.1} parent=0
    #allocation3 [shape = 'u8[8192]{0}', space=vmem, size = 0x2000, scoped, tag = 'output window, operand 0']
    #allocation4 [shape = 's32[2]{0}', space=sflag, size = 0x8, scoped, tag = 'scoped memory for tpu_custom_call.1']
    %10 = vsyncpa [#allocation4], 0
    %s11 = scalar_lea.sflag [#allocation4], 1
    %12 = vsyncpa %s11, 0
    loop: start=0, step=1, limit=4
    $region2: #{tpu_custom_call.1} parent=1 // loop_pre_header
      _
    $region3: #{tpu_custom_call.1} parent=1 // loop_header
      %s14 = sphi 0, %s18
      %p15 = scmp.ge.s32.totalorder %s14, 4
      %s24 = sphi 0, %s26
      %s27 = sphi 0, %s24
      %s28 = sphi 0, %s27
      %s44 = sphi 0, %s28
      %s48 = sphi 0, %s48
      %s50 = sphi 0, %s48
      %s51 = sphi 0, %s50
      %s65 = sphi 0, %s51
      %s69 = sphi 0, %s69
      %s71 = sphi 0, %s69
      %s72 = sphi 0, %s71
      %s86 = sphi 0, %s72
      %s90 = sphi 0, %s90
      %s92 = sphi 0, %s90
      %s93 = sphi 0, %s92
      %s107 = sphi 0, %s93
      %s111 = sphi 0, %s111
      %s113 = sphi 0, %s111
      %s114 = sphi 0, %s113
      %s128 = sphi 0, %s114
      %s134 = sphi 0, %s136
      %s137 = sphi 0, %s134
      %s138 = sphi 0, %s137
      %s154 = sphi 0, %s138
    $region4: #{tpu_custom_call.1} parent=1 // loop_header_branch
      %17 = sbr.rel (%p15) target = $region8
    $region5: #{tpu_custom_call.1} parent=1 // loop_body
      %s19 = ssub.s32 %s14, 1
      %s20 = ssub.s32 %s14, 2
      %s21 = sadd.s32 %s14, 1
      %s22 = ssub.s32 %s14, %s21
      %p23 = scmp.eq.s32.totalorder %s22, 0
      %s25 = sadd.s32 %s24, 1
      %s26 = scalar_select %p23, %s24, %s25
      %p29 = pneg %p23
      %p30 = scmp.eq.s32.totalorder %s14, 1
      %p31 = por %p29, %p30
      %p32 = scmp.ne.s32.totalorder %s24, %s27
      %p33 = scmp.eq.s32.totalorder %s14, 0
      %p34 = por %p32, %p33
      %p35 = scmp.ne.s32.totalorder %s24, %s27
      %p36 = scmp.eq.s32.totalorder %s19, 1
      %p37 = por %p35, %p36
      %p38 = scmp.ne.s32.totalorder %s27, %s28
      %p39 = scmp.eq.s32.totalorder %s19, 0
      %p40 = por %p38, %p39
      %p41 = scmp.ne.s32.totalorder %s27, %s28
      %p42 = scmp.eq.s32.totalorder %s20, 1
      %p43 = por %p41, %p42
      %p45 = scmp.ne.s32.totalorder %s28, %s44
      %p46 = scmp.eq.s32.totalorder %s20, 0
      %p47 = por %p45, %p46
      %s49 = sadd.s32 %s48, 1
      %p52 = scmp.eq.s32.totalorder %s14, 1
      %p53 = scmp.ne.s32.totalorder %s48, %s50
      %p54 = scmp.eq.s32.totalorder %s14, 0
      %p55 = por %p53, %p54
      %p56 = scmp.ne.s32.totalorder %s48, %s50
      %p57 = scmp.eq.s32.totalorder %s19, 1
      %p58 = por %p56, %p57
      %p59 = scmp.ne.s32.totalorder %s50, %s51
      %p60 = scmp.eq.s32.totalorder %s19, 0
      %p61 = por %p59, %p60
      %p62 = scmp.ne.s32.totalorder %s50, %s51
      %p63 = scmp.eq.s32.totalorder %s20, 1
      %p64 = por %p62, %p63
      %p66 = scmp.ne.s32.totalorder %s51, %s65
      %p67 = scmp.eq.s32.totalorder %s20, 0
      %p68 = por %p66, %p67
      %s70 = sadd.s32 %s69, 1
      %p73 = scmp.eq.s32.totalorder %s14, 1
      %p74 = scmp.ne.s32.totalorder %s69, %s71
      %p75 = scmp.eq.s32.totalorder %s14, 0
      %p76 = por %p74, %p75
      %p77 = scmp.ne.s32.totalorder %s69, %s71
      %p78 = scmp.eq.s32.totalorder %s19, 1
      %p79 = por %p77, %p78
      %p80 = scmp.ne.s32.totalorder %s71, %s72
      %p81 = scmp.eq.s32.totalorder %s19, 0
      %p82 = por %p80, %p81
      %p83 = scmp.ne.s32.totalorder %s71, %s72
      %p84 = scmp.eq.s32.totalorder %s20, 1
      %p85 = por %p83, %p84
      %p87 = scmp.ne.s32.totalorder %s72, %s86
      %p88 = scmp.eq.s32.totalorder %s20, 0
      %p89 = por %p87, %p88
      %s91 = sadd.s32 %s90, 1
      %p94 = scmp.eq.s32.totalorder %s14, 1
      %p95 = scmp.ne.s32.totalorder %s90, %s92
      %p96 = scmp.eq.s32.totalorder %s14, 0
      %p97 = por %p95, %p96
      %p98 = scmp.ne.s32.totalorder %s90, %s92
      %p99 = scmp.eq.s32.totalorder %s19, 1
      %p100 = por %p98, %p99
      %p101 = scmp.ne.s32.totalorder %s92, %s93
      %p102 = scmp.eq.s32.totalorder %s19, 0
      %p103 = por %p101, %p102
      %p104 = scmp.ne.s32.totalorder %s92, %s93
      %p105 = scmp.eq.s32.totalorder %s20, 1
      %p106 = por %p104, %p105
      %p108 = scmp.ne.s32.totalorder %s93, %s107
      %p109 = scmp.eq.s32.totalorder %s20, 0
      %p110 = por %p108, %p109
      %s112 = sadd.s32 %s111, 1
      %p115 = scmp.eq.s32.totalorder %s14, 1
      %p116 = scmp.ne.s32.totalorder %s111, %s113
      %p117 = scmp.eq.s32.totalorder %s14, 0
      %p118 = por %p116, %p117
      %p119 = scmp.ne.s32.totalorder %s111, %s113
      %p120 = scmp.eq.s32.totalorder %s19, 1
      %p121 = por %p119, %p120
      %p122 = scmp.ne.s32.totalorder %s113, %s114
      %p123 = scmp.eq.s32.totalorder %s19, 0
      %p124 = por %p122, %p123
      %p125 = scmp.ne.s32.totalorder %s113, %s114
      %p126 = scmp.eq.s32.totalorder %s20, 1
      %p127 = por %p125, %p126
      %p129 = scmp.ne.s32.totalorder %s114, %s128
      %p130 = scmp.eq.s32.totalorder %s20, 0
      %p131 = por %p129, %p130
      %s132 = ssub.s32 %s14, %s21
      %p133 = scmp.eq.s32.totalorder %s132, 0
      %s135 = sadd.s32 %s134, 1
      %s136 = scalar_select %p133, %s134, %s135
      %p139 = pneg %p133
      %p140 = scmp.eq.s32.totalorder %s14, 1
      %p141 = por %p139, %p140
      %p142 = scmp.ne.s32.totalorder %s134, %s137
      %p143 = scmp.eq.s32.totalorder %s14, 0
      %p144 = por %p142, %p143
      %p145 = scmp.ne.s32.totalorder %s134, %s137
      %p146 = scmp.eq.s32.totalorder %s19, 1
      %p147 = por %p145, %p146
      %p148 = scmp.ne.s32.totalorder %s137, %s138
      %p149 = scmp.eq.s32.totalorder %s19, 0
      %p150 = por %p148, %p149
      %p151 = scmp.ne.s32.totalorder %s137, %s138
      %p152 = scmp.eq.s32.totalorder %s20, 1
      %p153 = por %p151, %p152
      %p155 = scmp.ne.s32.totalorder %s138, %s154
      %p156 = scmp.eq.s32.totalorder %s20, 0
      %p157 = por %p155, %p156
      %p158 = scmp.le.s32.totalorder 1, %s14
      %p159 = scmp.lt.s32.totalorder %s14, 3
      %p160 = pnand %p158, %p159
      %p161 = pneg %p160
      // Predicated region
      $region9: #{tpu_custom_call.1} parent=5 // pred_check
        _
      $region10: #{tpu_custom_call.1} parent=5 // pred_check_branch
        %163 = sbr.rel (%p160) target = $region12
      $region11: #{tpu_custom_call.1} parent=5 // pred_region
        %s164 = ssub.s32 %s14, 1
        // Predicated region
        $region13: #{tpu_custom_call.1} parent=11 // pred_check
          %p165 = pneg %p61
        $region14: #{tpu_custom_call.1} parent=11 // pred_check_branch
          %167 = sbr.rel (%p165) target = $region16
        $region15: #{tpu_custom_call.1} parent=11 // pred_region
          _
        $region16: #{tpu_custom_call.1} parent=11 // pred_fallthru
          _
        // Predicated region
        $region17: #{tpu_custom_call.1} parent=11 // pred_check
          %p168 = pneg %p82
        $region18: #{tpu_custom_call.1} parent=11 // pred_check_branch
          %170 = sbr.rel (%p168) target = $region20
        $region19: #{tpu_custom_call.1} parent=11 // pred_region
          _
        $region20: #{tpu_custom_call.1} parent=11 // pred_fallthru
          _
        // Predicated region
        $region21: #{tpu_custom_call.1} parent=11 // pred_check
          %p171 = pneg %p103
        $region22: #{tpu_custom_call.1} parent=11 // pred_check_branch
          %173 = sbr.rel (%p171) target = $region24
        $region23: #{tpu_custom_call.1} parent=11 // pred_region
          _
        $region24: #{tpu_custom_call.1} parent=11 // pred_fallthru
          _
        // Predicated region
        $region25: #{tpu_custom_call.1} parent=11 // pred_check
          %p174 = pneg %p124
        $region26: #{tpu_custom_call.1} parent=11 // pred_check_branch
          %176 = sbr.rel (%p174) target = $region28
        $region27: #{tpu_custom_call.1} parent=11 // pred_region
          _
        $region28: #{tpu_custom_call.1} parent=11 // pred_fallthru
          _
      $region12: #{tpu_custom_call.1} parent=5 // pred_fallthru
        _
      %p177 = scmp.lt.s32.totalorder %s14, 2
      // Predicated region
      $region29: #{tpu_custom_call.1} parent=5 // pred_check
        %p178 = pneg %p177
      $region30: #{tpu_custom_call.1} parent=5 // pred_check_branch
        %180 = sbr.rel (%p178) target = $region32
      $region31: #{tpu_custom_call.1} parent=5 // pred_region
        // Predicated region
        $region33: #{tpu_custom_call.1} parent=31 // pred_check
          %p181 = pneg %p34
        $region34: #{tpu_custom_call.1} parent=31 // pred_check_branch
          %183 = sbr.rel (%p181) target = $region36
        $region35: #{tpu_custom_call.1} parent=31 // pred_region
          %p184 = scmp.lt.s32.totalorder %s14, 1
          %s185 = scalar_select %p184, %s14, 1
          %s186 = smul.addr %s185, 2
          %s187 = smul.addr %s186, 8
          %s188 = scalar_lea.vmem %s0, %s187
        $region36: #{tpu_custom_call.1} parent=31 // pred_fallthru
          _
      $region32: #{tpu_custom_call.1} parent=5 // pred_fallthru
        _
      %p189 = scmp.le.s32.totalorder 1, %s14
      %p190 = scmp.lt.s32.totalorder %s14, 3
      %p191 = pnand %p189, %p190
      %p192 = pneg %p191
      // Predicated region
      $region37: #{tpu_custom_call.1} parent=5 // pred_check
        _
      $region38: #{tpu_custom_call.1} parent=5 // pred_check_branch
        %194 = sbr.rel (%p191) target = $region40
      $region39: #{tpu_custom_call.1} parent=5 // pred_region
        %s195 = ssub.s32 %s14, 1
        %p196 = scmp.lt.s32.totalorder %s19, 1
        %s197 = scalar_select %p196, %s19, 1
        %s198 = smul.addr %s197, 2
        %s199 = smul.addr %s198, 8
        %s200 = scalar_lea.vmem %s0, %s199
        %p201 = pneg %p40
        %p202 = pneg %p37
        %p203 = pneg %p61
        %p204 = pneg %p58
        %p205 = pneg %p82
        %p206 = pneg %p79
        %p207 = pneg %p103
        %p208 = pneg %p100
        %p209 = pneg %p124
        %p210 = pneg %p121
        %p211 = pneg %p150
        %p212 = pneg %p147
        %s213 = sand.u32 %s137, 1
        %s214 = scalar_lea.sflag [#allocation4], %s213
        %s215 = sand.u32 %s137, 1
        %s216 = smul.addr %s215, 8
        %s217 = scalar_lea.vmem [#allocation3], %s216
        %p218 = scmp.lt.s32.totalorder %s19, 1
        %s219 = scalar_select %p218, %s19, 1
        %s220 = smul.addr %s219, 2
        %s221 = smul.addr %s220, 8
        %s222 = scalar_lea.vmem %s0, %s221
        %v223 = vld [vmem:[%s222] sm:$0xff]
        %v224 = vld [vmem:[%s222 + $0x8] sm:$0xff]
        %v225 = vld [vmem:[%s1] sm:$0xff]
        %v226 = vld [vmem:[%s1 + $0x8] sm:$0xff]
        %v227 = vld [vmem:[%s1 + $0x10] sm:$0xf]
        %v228 = vld [vmem:[%s1 + $0x18] sm:$0xf]
        %v229 = vld [vmem:[%s2] sm:$0x3]
        %v231 = vlaneseq
        %v232 = vshrl.u32 %v231, 7
        %v233 = vsub.s32 0, %v232
        %v234 = vrot.slane %v229, %v233
        %v235 = vlaneseq
        %v236 = vshrl.u32 %v235, 7
        %v237 = vsub.s32 1, %v236
        %v238 = vrot.slane %v229, %v237
        %vm241 = vcmask 97280
        %v243 = vsel %vm241, %v223, 0
        %v246 = vsel %vm241, %v224, 0
        %vm248 = vcmask 1043456
        %v250 = vsel %vm248, %v227, 0
        %v253 = vsel %vm248, %v228, 0
        %255 = vmatprep.subr.mxu0 0.0
        %256 = vmatpush1.msra.mxu0 0.0
        %257 = vmatprep.subr.mxu0 0.0
        %258 = vmatpush1.msra.mxu0 0.0
        %259 = vmatprep.subr.mxu0 0.0
        %260 = vmatpush1.msra.mxu0 0.0
        %261 = vmatprep.subr.mxu0 0.0
        %262 = vmatpush1.msra.mxu0 0.0
        %263 = vmatprep.subr.mxu0 0.0
        %264 = vmatpush1.msra.mxu0 0.0
        %265 = vmatprep.subr.mxu0 0.0
        %266 = vmatpush1.msra.mxu0 0.0
        %267 = vmatprep.subr.mxu0 0.0
        %268 = vmatpush1.msra.mxu0 0.0
        %269 = vmatprep.subr.mxu0 0.0
        %270 = vmatpush1.msra.mxu0 0.0
        %271 = vmatprep.subr.mxu0 0.0
        %272 = vmatpush1.msra.mxu0 0.0
        %273 = vmatprep.subr.mxu0 0.0
        %274 = vmatpush1.msra.mxu0 0.0
        %275 = vmatprep.subr.mxu0 0.0
        %276 = vmatpush1.msra.mxu0 0.0
        %277 = vmatprep.subr.mxu0 0.0
        %278 = vmatpush1.msra.mxu0 0.0
        %279 = vmatprep.subr.mxu0 0.0
        %280 = vmatpush1.msra.mxu0 0.0
        %281 = vmatprep.subr.mxu0 0.0
        %282 = vmatpush1.msra.mxu0 0.0
        %283 = vmatprep.subr.mxu0 %v253
        %284 = vmatpush1.msra.mxu0 %v250
        %285 = vmatprep.subr.mxu0 %v226
        %286 = vmatpush1.msra.mxu0 %v225
        %287 = vmatprep.subr.mxu0 0.0
        %288 = vmatpush2.msra.mxu0 0.0
        %289 = vmatprep.subr.mxu0 0.0
        %290 = vmatpush2.msra.mxu0 0.0
        %291 = vmatprep.subr.mxu0 0.0
        %292 = vmatpush2.msra.mxu0 0.0
        %293 = vmatprep.subr.mxu0 0.0
        %294 = vmatpush2.msra.mxu0 0.0
        %295 = vmatprep.subr.mxu0 0.0
        %296 = vmatpush2.msra.mxu0 0.0
        %297 = vmatprep.subr.mxu0 0.0
        %298 = vmatpush2.msra.mxu0 0.0
        %299 = vmatprep.subr.mxu0 0.0
        %300 = vmatpush2.msra.mxu0 0.0
        %301 = vmatprep.subr.mxu0 0.0
        %302 = vmatpush2.msra.mxu0 0.0
        %303 = vmatprep.subr.mxu0 0.0
        %304 = vmatpush2.msra.mxu0 0.0
        %305 = vmatprep.subr.mxu0 0.0
        %306 = vmatpush2.msra.mxu0 0.0
        %307 = vmatprep.subr.mxu0 0.0
        %308 = vmatpush2.msra.mxu0 0.0
        %309 = vmatprep.subr.mxu0 0.0
        %310 = vmatpush2.msra.mxu0 0.0
        %311 = vmatprep.subr.mxu0 0.0
        %312 = vmatpush2.msra.mxu0 0.0
        %313 = vmatprep.subr.mxu0 0.0
        %314 = vmatpush2.msra.mxu0 0.0
        %315 = vmatprep.subr.mxu0 0.0
        %316 = vmatpush2.msra.mxu0 0.0
        %317 = vmatprep.subr.mxu0 0.0
        %318 = vmatpush2.msra.mxu0 0.0
        %319 = vmatprep.mubr.f32.mxu0 0.0
        %320 = vmatmul.mubr.f32.gmra.mxu0 %v243
        %v321 = vpop.f32.mrf.mxu0
        %v322 = vadd.f32 %v234, %v321
        %v323 = vpop.f32.mrf.mxu0
        %v324 = vadd.f32 %v238, %v323
        %325 = vmatprep.mubr.f32.mxu0 0.0
        %326 = vmatmul.mubr.f32.gmra.mxu0 %v246
        %v327 = vpop.f32.mrf.mxu0
        %v328 = vadd.f32 %v234, %v327
        %v329 = vpop.f32.mrf.mxu0
        %v330 = vadd.f32 %v238, %v329
        %331 = vdwg.mxu0
        %vm332 = vcmp.ge.f32.partialorder %v322, 0.0
        %vm333 = vcmp.ge.f32.partialorder %v328, 0.0
        %v334 = vmul.f32 %v322, 0.1
        %v335 = vmul.f32 %v328, 0.1
        %v336 = vsel %vm332, %v322, %v334
        %v337 = vsel %vm333, %v328, %v335
        %v338 = vld [vmem:[%s3 + $0x2] sm:$0x1]
        %v339 = vlaneseq
        %v340 = vshrl.u32 %v339, 7
        %v341 = vsub.s32 0, %v340
        %v342 = vrot.slane %v338, %v341
        %v343 = vmul.f32 %v336, %v342
        %v344 = vmul.f32 %v337, %v342
        %345 = vst [vmem:[#allocation2] sm:$0x3] 0.0
        %346 = vst [vmem:[#allocation2 + $0x2] sm:$0xff] %v336
        %347 = vst [vmem:[#allocation2 + $0xa] sm:$0xff] %v337
        %v348 = vld [vmem:[#allocation2] sm:$0xff]
        %v349 = vld [vmem:[#allocation2 + $0x8] sm:$0xff]
        %v350 = vld [vmem:[%s3] sm:$0x1]
        %v351 = vlaneseq
        %v352 = vshrl.u32 %v351, 7
        %v353 = vsub.s32 0, %v352
        %v354 = vrot.slane %v350, %v353
        %v355 = vmul.f32 %v348, %v354
        %v356 = vmul.f32 %v349, %v354
        %v357 = vadd.f32 %v343, %v355
        %v358 = vadd.f32 %v344, %v356
        %v359 = vld [vmem:[#allocation2 + $0x1] sm:$0xff]
        %v360 = vld [vmem:[#allocation2 + $0x9] sm:$0xff]
        %v361 = vld [vmem:[%s3 + $0x1] sm:$0x1]
        %v362 = vlaneseq
        %v363 = vshrl.u32 %v362, 7
        %v364 = vsub.s32 0, %v363
        %v365 = vrot.slane %v361, %v364
        %v366 = vmul.f32 %v359, %v365
        %v367 = vmul.f32 %v360, %v365
        %v368 = vadd.f32 %v357, %v366
        %v369 = vadd.f32 %v358, %v367
        %v370 = vld [vmem:[%s4] sm:$0x1]
        %v372 = vlaneseq
        %v373 = vshrl.u32 %v372, 7
        %v374 = vsub.s32 0, %v373
        %v375 = vrot.slane %v370, %v374
        %v377 = vadd.f32 %v368, %v375
        %v378 = vadd.f32 %v369, %v375
        %vm379 = vcmp.ge.f32.partialorder %v377, 0.0
        %vm380 = vcmp.ge.f32.partialorder %v378, 0.0
        %v381 = vmul.f32 %v377, 0.1
        %v382 = vmul.f32 %v378, 0.1
        %v383 = vsel %vm379, %v377, %v381
        %v384 = vsel %vm380, %v378, %v382
        %v385 = vadd.f32 %v383, %v324
        %v386 = vadd.f32 %v384, %v330
        %vm387 = vcmp.ge.f32.partialorder %v385, 0.0
        %vm388 = vcmp.ge.f32.partialorder %v386, 0.0
        %v389 = vmul.f32 %v385, 0.1
        %v390 = vmul.f32 %v386, 0.1
        %v391 = vsel %vm387, %v385, %v389
        %v392 = vsel %vm388, %v386, %v390
        %393 = vst [vmem:[#allocation2] sm:$0xff] %v391
        %394 = vst [vmem:[#allocation2 + $0x8] sm:$0xff] %v392
        %v395 = vld [vmem:[#allocation2] ss:$2 sm:$0xff]
        %s396 = scalar_lea.vmem [#allocation2], 1
        %v397 = vld [vmem:[%s396] ss:$2 sm:$0xff]
        %v398 = vmax.f32 %v395, %v397
        %399 = vst [vmem:[%s217] sm:$0xff] %v398
        %s400 = sand.u32 %s137, 1
        %s401 = scalar_lea.sflag [#allocation4], %s400
        %s402 = sand.u32 %s137, 1
        %s403 = smul.addr %s402, 8
        %s404 = scalar_lea.vmem [#allocation3], %s403
        // Predicated region
        $region41: #{tpu_custom_call.1} parent=39 // pred_check
          %p405 = pneg %p147
        $region42: #{tpu_custom_call.1} parent=39 // pred_check_branch
          %407 = sbr.rel (%p405) target = $region44
        $region43: #{tpu_custom_call.1} parent=39 // pred_region
          %s409 = ssub.s32 128, 128
          %410 = vsyncadd %s401, %s409
          %s411 = smul.addr %s19, 128
          %s412 = scalar_lea.hbm %s5, %s411
          %s414 = sshll.u32 %s404, 4
          %s415 = int_to_ptr.vmem [resolvable:$true] %s414
          %417 = dma.vmem_to_hbm [thread:$0]  %s415, 128, %s412, %s401
        $region44: #{tpu_custom_call.1} parent=39 // pred_fallthru
          _
      $region40: #{tpu_custom_call.1} parent=5 // pred_fallthru
        _
      %p418 = scmp.le.s32.totalorder 2, %s14
      // Predicated region
      $region45: #{tpu_custom_call.1} parent=5 // pred_check
        %p419 = pneg %p418
      $region46: #{tpu_custom_call.1} parent=5 // pred_check_branch
        %421 = sbr.rel (%p419) target = $region48
      $region47: #{tpu_custom_call.1} parent=5 // pred_region
        %s422 = ssub.s32 %s14, 2
        // Predicated region
        $region49: #{tpu_custom_call.1} parent=47 // pred_check
          %p423 = pneg %p153
        $region50: #{tpu_custom_call.1} parent=47 // pred_check_branch
          %425 = sbr.rel (%p423) target = $region52
        $region51: #{tpu_custom_call.1} parent=47 // pred_region
          %s426 = sand.u32 %s138, 1
          %s427 = scalar_lea.sflag [#allocation4], %s426
          %s428 = sand.u32 %s138, 1
          %s429 = smul.addr %s428, 8
          %s430 = scalar_lea.vmem [#allocation3], %s429
          %431 = dma.done %s427, 128
        $region52: #{tpu_custom_call.1} parent=47 // pred_fallthru
          _
      $region48: #{tpu_custom_call.1} parent=5 // pred_fallthru
        _
    $region6: #{tpu_custom_call.1} parent=1 // loop_footer
      %s18 = sadd.s32 1, %s14
    $region7: #{tpu_custom_call.1} parent=1 // loop_footer_branch
      %13 = sbr.rel target = $region3
    $region8: #{tpu_custom_call.1} parent=1 // loop_exit
      _
    %432 = vsyncpa [#allocation4], 1
    %s433 = scalar_lea.sflag [#allocation4], 1
    %434 = vsyncpa %s433, 1

</llo_original>
